<compile_context>
chip_gen: v5e
topology: v5e:2x2
jax: 0.10.0
libtpu: 0.0.40
codegen_flags: <defaults>
</compile_context>

<pallas_src>
import jax
import jax.numpy as jnp
from jax.experimental import pallas as pl
from jax.experimental.pallas import tpu as pltpu

LANE = 128  # pad the (20 -> 2) output layer out to one dense lane tile


def mlp_kernel(x_ref, w1_ref, b1_ref, w2_ref, b2_ref, o_ref):
    # Layer 1: (TB, D) @ (D, H) + (1, H) on the MXU, f32 accumulation.
    h = jnp.dot(x_ref[...], w1_ref[...], preferred_element_type=jnp.float32)
    h = h + b1_ref[...]
    # Sigmoid: exp on the EUP; approximate reciprocal also on the EUP slot
    # (vrcp), so no VALU work beyond the add/negate.
    h = pl.reciprocal(1.0 + jnp.exp(-h), approx=True)
    # Layer 2: (TB, H) @ (H, 128) + (1, 128). w2/b2 are zero-padded to 128
    # lanes so this result tile and the output store are lane-dense.
    y = jnp.dot(h, w2_ref[...], preferred_element_type=jnp.float32)
    o_ref[...] = (y + b2_ref[...]).astype(o_ref.dtype)


def _pad_output_lanes(w2, b2):
    H, O = w2.shape
    w2p = jnp.zeros((H, LANE), w2.dtype).at[:, :O].set(w2)
    b2p = jnp.zeros((1, LANE), b2.dtype).at[:, :O].set(b2)
    return w2p, b2p


def torch_model_forward(x, w1, b1, w2, b2, *, tb=256):
    """y = sigmoid(x @ w1 + b1) @ w2 + b2.

    x: (B, D) f32; w1: (D, H); b1: (1, H); w2: (H, O); b2: (1, O).
    Weights are stored pre-transposed (in_features, out_features) relative to
    torch's nn.Linear so the kernel computes x @ W + b directly.
    """
    B, D = x.shape
    H = w1.shape[1]
    O = w2.shape[1]
    w2p, b2p = _pad_output_lanes(w2, b2)

    if B <= tb:
        # Single tile: no grid, no pipeline scaffolding. Every operand is a
        # whole-array VMEM block (block shape == array shape, so the (8,128)
        # rule is trivially satisfied).
        vmem = pltpu.MemorySpace.VMEM
        y = pl.pallas_call(
            mlp_kernel,
            out_shape=jax.ShapeDtypeStruct((B, LANE), jnp.float32),
            in_specs=[pl.BlockSpec(memory_space=vmem)] * 5,
            out_specs=pl.BlockSpec(memory_space=vmem),
        )(x, w1, b1, w2p, b2p)
        return y[:, :O]

    # Large batch: tile over B only. Weights/biases use a constant index_map
    # (VMEM-resident across the whole grid); batch axis is "parallel" so both
    # TensorCores are used on v7x.
    n_tiles = pl.cdiv(B, tb)
    b_pad = n_tiles * tb
    if b_pad != B:
        x = jnp.pad(x, ((0, b_pad - B), (0, 0)))
    y = pl.pallas_call(
        mlp_kernel,
        out_shape=jax.ShapeDtypeStruct((b_pad, LANE), jnp.float32),
        grid=(n_tiles,),
        in_specs=[
            pl.BlockSpec((tb, D), lambda i: (i, 0)),
            pl.BlockSpec((D, H), lambda i: (0, 0)),
            pl.BlockSpec((1, H), lambda i: (0, 0)),
            pl.BlockSpec((H, LANE), lambda i: (0, 0)),
            pl.BlockSpec((1, LANE), lambda i: (0, 0)),
        ],
        out_specs=pl.BlockSpec((tb, LANE), lambda i: (i, 0)),
        compiler_params=pltpu.CompilerParams(
            dimension_semantics=("parallel",)),
    )(x, w1, b1, w2p, b2p)
    return y[:B, :O]


if __name__ == "__main__":
    key = jax.random.PRNGKey(0)
    k_x, k_w1, k_b1, k_w2, k_b2, k_xl = jax.random.split(key, 6)

    input_size = 32   # model hyperparameter (nn.Linear(input_size, 20))
    hidden = 20
    out_dim = 2
    batch = 8

    x = jax.random.normal(k_x, (batch, input_size), dtype=jnp.float32)

    # Deterministic parameter init (torch-like uniform(-1/sqrt(fan_in), +)).
    lim1 = 1.0 / jnp.sqrt(input_size)
    w1 = jax.random.uniform(k_w1, (input_size, hidden), jnp.float32, -lim1, lim1)
    b1 = jax.random.uniform(k_b1, (1, hidden), jnp.float32, -lim1, lim1)
    lim2 = 1.0 / jnp.sqrt(hidden)
    w2 = jax.random.uniform(k_w2, (hidden, out_dim), jnp.float32, -lim2, lim2)
    b2 = jax.random.uniform(k_b2, (1, out_dim), jnp.float32, -lim2, lim2)

    def ref_fwd(xs):
        return jax.nn.sigmoid(xs @ w1 + b1) @ w2 + b2

    # Tolerance note: the EUP approximate reciprocal (~1e-4 relative) propagates
    # to at most ~1e-3 absolute error on the 2-wide output; 2e-2 gives >10x
    # margin. With approx=False the kernel matches the reference to 1e-5.
    ATOL = 2e-2

    # Small-batch path (single tile, no grid).
    y = torch_model_forward(x, w1, b1, w2, b2)
    jax.block_until_ready(y)
    assert y.shape == (batch, out_dim)
    assert jnp.allclose(y, ref_fwd(x), atol=ATOL, rtol=ATOL), "small-batch mismatch"

    # Large-batch path (batch-tiled grid, weights VMEM-resident, parallel axis).
    big = 512
    xl = jax.random.normal(k_xl, (big, input_size), dtype=jnp.float32)
    yl = torch_model_forward(xl, w1, b1, w2, b2, tb=256)
    jax.block_until_ready(yl)
    assert yl.shape == (big, out_dim)
    assert jnp.allclose(yl, ref_fwd(xl), atol=ATOL, rtol=ATOL), "batched mismatch"

    print("KERNEL_OK")
</pallas_src>

<mosaic_0001>
module attributes {stable_mosaic.version = 11 : i64} {
  func.func @mlp_kernel(%arg0: memref<8x32xf32, #tpu.memory_space<vmem>>, %arg1: memref<32x20xf32, #tpu.memory_space<vmem>>, %arg2: memref<1x20xf32, #tpu.memory_space<vmem>>, %arg3: memref<20x128xf32, #tpu.memory_space<vmem>>, %arg4: memref<1x128xf32, #tpu.memory_space<vmem>>, %arg5: memref<8x128xf32, #tpu.memory_space<vmem>>) attributes {dimension_semantics = [], scalar_prefetch = 0 : i64, scratch_operands = 0 : i64, tpu.core_type = #tpu.core_type<tc>} {
    %c0 = arith.constant 0 : index
    %c0_0 = arith.constant 0 : index
    %0 = vector.load %arg0[%c0, %c0_0] : memref<8x32xf32, #tpu.memory_space<vmem>>, vector<8x32xf32>
    %c0_1 = arith.constant 0 : index
    %c0_2 = arith.constant 0 : index
    %1 = vector.load %arg1[%c0_1, %c0_2] : memref<32x20xf32, #tpu.memory_space<vmem>>, vector<32x20xf32>
    %cst = arith.constant dense<0.000000e+00> : vector<8x20xf32>
    %2 = tpu.matmul %0, %1, %cst {dimension_numbers = #tpu.dot_dimension_numbers<[1], [0], [0], [1], [0, 0, 1, 1], [], []>} : vector<8x32xf32>, vector<32x20xf32>, vector<8x20xf32> -> vector<8x20xf32>
    %c0_3 = arith.constant 0 : index
    %c0_4 = arith.constant 0 : index
    %3 = vector.load %arg2[%c0_3, %c0_4] : memref<1x20xf32, #tpu.memory_space<vmem>>, vector<1x20xf32>
    %4 = vector.broadcast %3 : vector<1x20xf32> to vector<8x20xf32>
    %5 = arith.addf %2, %4 : vector<8x20xf32>
    %cst_5 = arith.constant 0.000000e+00 : f32
    %6 = vector.broadcast %cst_5 : f32 to vector<8x20xf32>
    %7 = arith.subf %6, %5 : vector<8x20xf32>
    %8 = math.exp %7 : vector<8x20xf32>
    %cst_6 = arith.constant 1.000000e+00 : f32
    %9 = vector.broadcast %cst_6 : f32 to vector<8x20xf32>
    %10 = arith.addf %9, %8 : vector<8x20xf32>
    %11 = tpu.reciprocal %10 {approx = true} : vector<8x20xf32> -> vector<8x20xf32>
    %c0_7 = arith.constant 0 : index
    %c0_8 = arith.constant 0 : index
    %12 = vector.load %arg3[%c0_7, %c0_8] : memref<20x128xf32, #tpu.memory_space<vmem>>, vector<20x128xf32>
    %cst_9 = arith.constant dense<0.000000e+00> : vector<8x128xf32>
    %13 = tpu.matmul %11, %12, %cst_9 {dimension_numbers = #tpu.dot_dimension_numbers<[1], [0], [0], [1], [0, 0, 1, 1], [], []>} : vector<8x20xf32>, vector<20x128xf32>, vector<8x128xf32> -> vector<8x128xf32>
    %c0_10 = arith.constant 0 : index
    %c0_11 = arith.constant 0 : index
    %14 = vector.load %arg4[%c0_10, %c0_11] : memref<1x128xf32, #tpu.memory_space<vmem>>, vector<1x128xf32>
    %15 = vector.broadcast %14 : vector<1x128xf32> to vector<8x128xf32>
    %16 = arith.addf %13, %15 : vector<8x128xf32>
    %c0_12 = arith.constant 0 : index
    %c0_13 = arith.constant 0 : index
    %17 = vector.load %arg5[%c0_12, %c0_13] : memref<8x128xf32, #tpu.memory_space<vmem>>, vector<8x128xf32>
    tpu.vector_store %arg5[%c0_12, %c0_13], %16 {strides = array<i32>} : memref<8x128xf32, #tpu.memory_space<vmem>>, vector<8x128xf32>,
    return
  }
}

</mosaic_0001>

<llo_original>
// kernel: tpu_custom_call.1
$region0: #{tpu_custom_call.1}
  #allocation0 [shape = 'u32[]', space=smem, size = 0x4, offset = 0x4, fixed_abs, tag = 'smem constant byte address 0x4 - core index']
  #allocation1 [shape = 'u32[72,128]{1,0:T(1,128)}', space=vmem, size = 0x9000, scoped, tag = 'internal scratch']
  %s0 = inlined_call_operand.vmem [shape: f32[8,32], index: 0, kind: input, shape index: {}]
  %s1 = inlined_call_operand.vmem [shape: f32[32,20], index: 1, kind: input, shape index: {}]
  %s2 = inlined_call_operand.vmem [shape: f32[1,20], index: 2, kind: input, shape index: {}]
  %s3 = inlined_call_operand.vmem [shape: f32[20,128], index: 3, kind: input, shape index: {}]
  %s4 = inlined_call_operand.vmem [shape: f32[1,128], index: 4, kind: input, shape index: {}]
  %s5 = inlined_call_operand.hbm [shape: f32[8,128], index: 5, kind: output, shape index: {}]
  %s6 = sld [smem:[#allocation0]]
  $region30: #{tpu_custom_call.1} parent=0
    _
  %s8 = ssub.s32 1, %s6
  %s9 = scalar_select 0, %s8, %s6
  $region1: #{tpu_custom_call.1} parent=0
    #allocation2 [shape = 'u8[4096]{0}', space=vmem, size = 0x1000, scoped, tag = 'output window, operand 0, single buffered']
    #allocation3 [shape = 's32[1]{0}', space=sflag, size = 0x4, scoped, tag = 'scoped memory for tpu_custom_call.1']
    %10 = vsyncpa [#allocation3], 0
    // Predicated region
    $region2: #{tpu_custom_call.1} parent=1 // pred_check
      _
    $region3: #{tpu_custom_call.1} parent=1 // pred_check_branch
      %12 = sbr.rel (0) target = $region5
    $region4: #{tpu_custom_call.1} parent=1 // pred_region
      _
    $region5: #{tpu_custom_call.1} parent=1 // pred_fallthru
      _
    // Predicated region
    $region6: #{tpu_custom_call.1} parent=1 // pred_check
      _
    $region7: #{tpu_custom_call.1} parent=1 // pred_check_branch
      %14 = sbr.rel (0) target = $region9
    $region8: #{tpu_custom_call.1} parent=1 // pred_region
      _
    $region9: #{tpu_custom_call.1} parent=1 // pred_fallthru
      _
    // Predicated region
    $region10: #{tpu_custom_call.1} parent=1 // pred_check
      _
    $region11: #{tpu_custom_call.1} parent=1 // pred_check_branch
      %16 = sbr.rel (0) target = $region13
    $region12: #{tpu_custom_call.1} parent=1 // pred_region
      _
    $region13: #{tpu_custom_call.1} parent=1 // pred_fallthru
      _
    // Predicated region
    $region14: #{tpu_custom_call.1} parent=1 // pred_check
      _
    $region15: #{tpu_custom_call.1} parent=1 // pred_check_branch
      %18 = sbr.rel (0) target = $region17
    $region16: #{tpu_custom_call.1} parent=1 // pred_region
      _
    $region17: #{tpu_custom_call.1} parent=1 // pred_fallthru
      _
    // Predicated region
    $region18: #{tpu_custom_call.1} parent=1 // pred_check
      _
    $region19: #{tpu_custom_call.1} parent=1 // pred_check_branch
      %20 = sbr.rel (0) target = $region21
    $region20: #{tpu_custom_call.1} parent=1 // pred_region
      _
    $region21: #{tpu_custom_call.1} parent=1 // pred_fallthru
      _
    %v21 = vld [vmem:[%s0] sm:$0xff]
    %v22 = vld [vmem:[%s1] sm:$0xff]
    %v23 = vld [vmem:[%s1 + $0x8] sm:$0xff]
    %v24 = vld [vmem:[%s1 + $0x10] sm:$0xff]
    %v25 = vld [vmem:[%s1 + $0x18] sm:$0xff]
    %v26 = vld [vmem:[%s2] sm:$0x1]
    %v28 = vperm.slane %v26, 0
    %vm30 = vcmask 261120
    %v32 = vsel %vm30, %v21, 0
    %34 = vmatpush.msra.mxu0 0.0
    %35 = vmatpush.msra.mxu0 0.0
    %36 = vmatpush.msra.mxu0 0.0
    %37 = vmatpush.msra.mxu0 0.0
    %38 = vmatpush.msra.mxu0 0.0
    %39 = vmatpush.msra.mxu0 0.0
    %40 = vmatpush.msra.mxu0 0.0
    %41 = vmatpush.msra.mxu0 0.0
    %42 = vmatpush.msra.mxu0 0.0
    %43 = vmatpush.msra.mxu0 0.0
    %44 = vmatpush.msra.mxu0 0.0
    %45 = vmatpush.msra.mxu0 0.0
    %46 = vmatpush.msra.mxu0 %v25
    %47 = vmatpush.msra.mxu0 %v24
    %48 = vmatpush.msra.mxu0 %v23
    %49 = vmatpush.msra.mxu0 %v22
    %50 = vmatmul.f32.gmra.mxu0 %v32
    %v51 = vpop.f32.mrf.mxu0
    %v52 = vadd.f32 %v28, %v51
    %53 = vdwg.mxu0
    %v54 = vsub.f32 0.0, %v52
    %v55 = vmul.f32 %v54, 1.442695
    %v56 = vpow.pop %v55
    %v57 = vadd.f32 %v56, 1.0
    %v58 = vrcp.pop %v57
    %v59 = vld [vmem:[%s3] sm:$0xff]
    %v60 = vld [vmem:[%s3 + $0x8] sm:$0xff]
    %v61 = vld [vmem:[%s3 + $0x10] sm:$0xf]
    %v62 = vld [vmem:[%s4] sm:$0x1]
    %v64 = vperm.slane %v62, 0
    %vm66 = vcmask 162816
    %v68 = vsel %vm66, %v58, 0
    %vm70 = vcmask 1043456
    %v72 = vsel %vm70, %v61, 0
    %74 = vmatpush.msra.mxu0 0.0
    %75 = vmatpush.msra.mxu0 0.0
    %76 = vmatpush.msra.mxu0 0.0
    %77 = vmatpush.msra.mxu0 0.0
    %78 = vmatpush.msra.mxu0 0.0
    %79 = vmatpush.msra.mxu0 0.0
    %80 = vmatpush.msra.mxu0 0.0
    %81 = vmatpush.msra.mxu0 0.0
    %82 = vmatpush.msra.mxu0 0.0
    %83 = vmatpush.msra.mxu0 0.0
    %84 = vmatpush.msra.mxu0 0.0
    %85 = vmatpush.msra.mxu0 0.0
    %86 = vmatpush.msra.mxu0 0.0
    %87 = vmatpush.msra.mxu0 %v72
    %88 = vmatpush.msra.mxu0 %v60
    %89 = vmatpush.msra.mxu0 %v59
    %90 = vmatmul.f32.gmra.mxu0 %v68
    %v91 = vpop.f32.mrf.mxu0
    %v92 = vadd.f32 %v64, %v91
    %93 = vdwg.mxu0
    %94 = vst [vmem:[#allocation2] sm:$0xff] %v92
    // Predicated region
    $region22: #{tpu_custom_call.1} parent=1 // pred_check
      _
    $region23: #{tpu_custom_call.1} parent=1 // pred_check_branch
      %96 = sbr.rel (0) target = $region25
    $region24: #{tpu_custom_call.1} parent=1 // pred_region
      %98 = vsyncadd [#allocation3], 0
      %s100 = sshll.u32 [#allocation2], 4
      %s101 = int_to_ptr.vmem [resolvable:$true] %s100
      %s102 = sshll.u32 %s5, 4
      %s103 = int_to_ptr.hbm [resolvable:$true] %s102
      %105 = dma.vmem_to_hbm [thread:$0]  %s101, 128, %s103, [#allocation3]
    $region25: #{tpu_custom_call.1} parent=1 // pred_fallthru
      _
    // Predicated region
    $region26: #{tpu_custom_call.1} parent=1 // pred_check
      _
    $region27: #{tpu_custom_call.1} parent=1 // pred_check_branch
      %107 = sbr.rel (0) target = $region29
    $region28: #{tpu_custom_call.1} parent=1 // pred_region
      %109 = dma.done [#allocation3], 128
    $region29: #{tpu_custom_call.1} parent=1 // pred_fallthru
      _
    %110 = vsyncpa [#allocation3], 1

</llo_original>
